<compile_context>
chip_gen: v6e
topology: v6e:2x2x1
jax: 0.10.0
libtpu: 0.0.40
codegen_flags: <defaults>
</compile_context>

<pallas_src>
import jax
import jax.numpy as jnp
from jax.experimental import pallas as pl
from jax.experimental.pallas import tpu as pltpu


def _round_up(n, m):
    return ((n + m - 1) // m) * m


def _vmem_budget_bytes():
    # Conservative default: v7x has 64 MiB VMEM per TensorCore.
    cap = 64 * 1024 * 1024
    try:
        info = pltpu.get_tpu_info()
        cap = int(getattr(info, "vmem_capacity_bytes", cap)) or cap
    except Exception:
        pass
    return (cap * 3) // 4


# --------------------------- kernels ---------------------------------------

def _resident_kernel(x_ref, w1t_ref, b1_ref, w2t_ref, b2_ref, o_ref):
    # first wrapped module:  h = x @ W1^T + b1   (weights pre-transposed)
    h = jnp.dot(x_ref[...], w1t_ref[...], preferred_element_type=jnp.float32)
    h = h + b1_ref[...]                       # (1, D_HID) broadcasts over rows
    # second wrapped module: y = h @ W2^T + b2
    y = jnp.dot(h.astype(w2t_ref.dtype), w2t_ref[...],
                preferred_element_type=jnp.float32)
    y = y + b2_ref[...]
    o_ref[...] = y.astype(o_ref.dtype)


def _ktiled_kernel(x_ref, w1t_ref, b1_ref, w2t_ref, b2_ref, o_ref, acc_ref):
    # Reduction-tiled over D_HID: each step computes a tk-wide slice of h and
    # accumulates its contribution to y in an f32 scratch accumulator.
    k = pl.program_id(1)

    @pl.when(k == 0)
    def _():
        acc_ref[...] = jnp.zeros_like(acc_ref)

    h = jnp.dot(x_ref[...], w1t_ref[...], preferred_element_type=jnp.float32)
    h = h + b1_ref[...]
    acc_ref[...] += jnp.dot(h.astype(w2t_ref.dtype), w2t_ref[...],
                            preferred_element_type=jnp.float32)

    @pl.when(k == pl.num_programs(1) - 1)
    def _():
        o_ref[...] = (acc_ref[...] + b2_ref[...]).astype(o_ref.dtype)


# --------------------------- wrapper ----------------------------------------

def prepare_composed_params(w1, b1, w2, b2, compute_dtype=None):
    """One-time layout plumbing (NOT per-forward-call).

    Transposes the PyTorch-convention weights (W1: (D_HID,D_IN), W2:
    (D_OUT,D_HID)) and zero-pads feature dims to lane-dense multiples of 128.
    Biases stay f32 (added to the f32 MXU accumulators).
    """
    d_hid, d_in = w1.shape
    d_out, _ = w2.shape
    d_in_p = _round_up(d_in, 128)
    d_hid_p = _round_up(d_hid, 128)
    d_out_p = _round_up(d_out, 128)
    wdt = compute_dtype if compute_dtype is not None else w1.dtype
    w1t = jnp.zeros((d_in_p, d_hid_p), wdt).at[:d_in, :d_hid].set(w1.T.astype(wdt))
    w2t = jnp.zeros((d_hid_p, d_out_p), wdt).at[:d_hid, :d_out].set(w2.T.astype(wdt))
    b1p = jnp.zeros((1, d_hid_p), jnp.float32).at[0, :d_hid].set(b1.astype(jnp.float32))
    b2p = jnp.zeros((1, d_out_p), jnp.float32).at[0, :d_out].set(b2.astype(jnp.float32))
    return (w1t, b1p, w2t, b2p), (d_in, d_hid, d_out)


def composed_forward(x, params, dims, *, tm=None, max_resident_weight_bytes=None):
    """x: (B, S, D_IN) -> (B, S, D_OUT); both Linear layers fused in one kernel."""
    w1t, b1p, w2t, b2p = params
    d_in, d_hid, d_out = dims
    d_in_p, d_hid_p = w1t.shape
    d_out_p = w2t.shape[1]
    B, S, _ = x.shape
    rows = B * S

    cdtype = w1t.dtype
    cbytes = jnp.dtype(cdtype).itemsize
    obytes = jnp.dtype(x.dtype).itemsize

    vmem_budget = _vmem_budget_bytes()
    weight_bytes = (w1t.size + w2t.size) * cbytes + (b1p.size + b2p.size) * 4
    wt_cap = (max_resident_weight_bytes if max_resident_weight_bytes is not None
              else vmem_budget // 2)
    use_ktiled = weight_bytes > wt_cap

    # ---- row-tile size from the VMEM budget -------------------------------
    if tm is None:
        # per-row cost: double-buffered x & out tiles + f32 h and y intermediates
        per_row = cbytes * 2 * d_in_p + obytes * 2 * d_out_p + 4 * (d_hid_p + d_out_p)
        resident_w = 0 if use_ktiled else weight_bytes
        avail = max(vmem_budget - resident_w, per_row * 8)
        tm = max(8, min(1024, ((avail // per_row) // 8) * 8))
        # >= 2 grid steps when rows permit: megacore sharding + DMA pipelining.
        if rows >= 16:
            tm = min(tm, _round_up((rows + 1) // 2, 8))
        tm = max(tm, 8)

    rows_p = _round_up(rows, tm)
    grid_rows = rows_p // tm

    # ---- activations: only copy/pad when actually needed ------------------
    x2d = x.reshape(rows, d_in)
    if (d_in_p != d_in) or (rows_p != rows) or (x2d.dtype != cdtype):
        x2d = jnp.zeros((rows_p, d_in_p), cdtype).at[:rows, :d_in].set(
            x2d.astype(cdtype))

    flops = 2 * rows_p * (d_in_p * d_hid_p + d_hid_p * d_out_p)
    bytes_accessed = int(x2d.size * cbytes + weight_bytes + rows_p * d_out_p * obytes)

    tk = d_hid_p  # only used on the k-tiled path
    if not use_ktiled:
        grid = (grid_rows,)
        kernel = _resident_kernel
        scratch = []
        semantics = ("parallel",)
        footprint = (weight_bytes
                     + 2 * tm * d_in_p * cbytes + 2 * tm * d_out_p * obytes
                     + tm * (d_hid_p + d_out_p) * 4)
    else:
        # grow tk while double-buffered per-step weight tiles stay small
        tk = 128
        while (tk * 2 <= d_hid_p and d_hid_p % (tk * 2) == 0 and
               2 * (d_in_p * (tk * 2) + (tk * 2) * d_out_p) * cbytes < vmem_budget // 3):
            tk *= 2
        nk = d_hid_p // tk
        grid = (grid_rows, nk)
        kernel = _ktiled_kernel
        scratch = [pltpu.VMEM((tm, d_out_p), jnp.float32)]
        semantics = ("parallel", "arbitrary")
        footprint = (2 * (d_in_p * tk + tk * d_out_p) * cbytes
                     + 2 * tm * d_in_p * cbytes + 2 * tm * d_out_p * obytes
                     + tm * (tk + 2 * d_out_p) * 4
                     + (b1p.size + b2p.size) * 4)

    vmem_limit = int(min(max(footprint * 1.3, 32 * 1024 * 1024), 100 * 1024 * 1024))

    def _specs(single_buffer_consts):
        kw = dict(pipeline_mode=pl.Buffered(1)) if single_buffer_consts else {}
        if not use_ktiled:
            return [
                # activation tile marches down the rows
                pl.BlockSpec((tm, d_in_p), lambda i: (i, 0)),
                # constant block index -> VMEM-resident weights/biases
                pl.BlockSpec((d_in_p, d_hid_p), lambda i: (0, 0), **kw),
                pl.BlockSpec((1, d_hid_p), lambda i: (0, 0), **kw),
                pl.BlockSpec((d_hid_p, d_out_p), lambda i: (0, 0), **kw),
                pl.BlockSpec((1, d_out_p), lambda i: (0, 0), **kw),
            ]
        else:
            return [
                pl.BlockSpec((tm, d_in_p), lambda i, k: (i, 0)),
                pl.BlockSpec((d_in_p, tk), lambda i, k: (0, k)),
                pl.BlockSpec((1, tk), lambda i, k: (0, k)),
                pl.BlockSpec((tk, d_out_p), lambda i, k: (k, 0)),
                pl.BlockSpec((1, d_out_p), lambda i, k: (0, 0), **kw),
            ]

    def _call(in_specs):
        return pl.pallas_call(
            kernel,
            out_shape=jax.ShapeDtypeStruct((rows_p, d_out_p), x.dtype),
            grid_spec=pltpu.PrefetchScalarGridSpec(
                num_scalar_prefetch=0,
                grid=grid,
                in_specs=in_specs,
                out_specs=pl.BlockSpec(
                    (tm, d_out_p),
                    (lambda i: (i, 0)) if not use_ktiled else (lambda i, k: (i, 0))),
                scratch_shapes=scratch),
            compiler_params=pltpu.CompilerParams(
                dimension_semantics=semantics,
                vmem_limit_bytes=vmem_limit),
            cost_estimate=pl.CostEstimate(
                flops=flops, transcendentals=0, bytes_accessed=bytes_accessed),
        )(x2d, w1t, b1p, w2t, b2p)

    try:
        out2d = _call(_specs(single_buffer_consts=True))
    except Exception:
        # Older jax without BlockSpec pipeline_mode: fall back to default buffering.
        out2d = _call(_specs(single_buffer_consts=False))

    # Strip padding only when there is any.
    if rows_p == rows and d_out_p == d_out:
        return out2d.reshape(B, S, d_out)
    return out2d[:rows, :d_out].reshape(B, S, d_out)


def init_linear_params(key, d_out, d_in, dtype=jnp.float32):
    """Deterministic init matching nn.Linear's shapes: W (d_out, d_in), b (d_out,)."""
    kw, kb = jax.random.split(key)
    bound = 1.0 / jnp.sqrt(jnp.float32(d_in))
    w = jax.random.uniform(kw, (d_out, d_in), dtype, minval=-bound, maxval=bound)
    b = jax.random.uniform(kb, (d_out,), dtype, minval=-bound, maxval=bound)
    return w, b


if __name__ == "__main__":
    B, S = 2, 8
    D_IN, D_HID, D_OUT = 32, 64, 16

    key = jax.random.PRNGKey(0)
    kx, k1, k2 = jax.random.split(key, 3)

    x = jax.random.normal(kx, (B, S, D_IN), jnp.float32)
    w1, b1 = init_linear_params(k1, D_HID, D_IN)   # first wrapped module
    w2, b2 = init_linear_params(k2, D_OUT, D_HID)  # second wrapped module

    # reference: Composed.forward == second(first(x)), computed at high precision
    h_ref = jnp.dot(x.reshape(-1, D_IN), w1.T, precision="highest") + b1
    ref = (jnp.dot(h_ref, w2.T, precision="highest") + b2).reshape(B, S, D_OUT)

    # 1) resident-weights path, f32
    params, dims = prepare_composed_params(w1, b1, w2, b2)
    y = jax.block_until_ready(composed_forward(x, params, dims))
    assert y.shape == (B, S, D_OUT)
    assert jnp.allclose(y, ref, atol=2e-2, rtol=2e-2)

    # 2) reduction-tiled fallback path (forced), f32
    y2 = jax.block_until_ready(
        composed_forward(x, params, dims, max_resident_weight_bytes=0))
    assert jnp.allclose(y2, ref, atol=2e-2, rtol=2e-2)

    # 3) bf16 MXU path (bf16 activations/weights, f32 accumulation & bias adds)
    params_bf, dims_bf = prepare_composed_params(w1, b1, w2, b2,
                                                 compute_dtype=jnp.bfloat16)
    y3 = jax.block_until_ready(composed_forward(x, params_bf, dims_bf))
    assert jnp.allclose(y3, ref, atol=5e-2, rtol=5e-2)

    # TODO(synk): tag_kwargs / main-arg routing in Composed.forward is pure
    # Python argument plumbing with no tensor compute; it is not translated.

    print("KERNEL_OK")
</pallas_src>

<mosaic_0001>
module attributes {stable_mosaic.version = 11 : i64} {
  func.func @_resident_kernel(%arg0: i32, %arg1: memref<8x128xf32, #tpu.memory_space<vmem>>, %arg2: memref<128x128xf32, #tpu.memory_space<vmem>>, %arg3: memref<1x128xf32, #tpu.memory_space<vmem>>, %arg4: memref<128x128xf32, #tpu.memory_space<vmem>>, %arg5: memref<1x128xf32, #tpu.memory_space<vmem>>, %arg6: memref<8x128xf32, #tpu.memory_space<vmem>>) attributes {dimension_semantics = [#tpu.dimension_semantics<parallel>], iteration_bounds = array<i64: 2>, scalar_prefetch = 0 : i64, scratch_operands = 0 : i64, tpu.core_type = #tpu.core_type<tc>, window_params = [{transform_indices = @transform_0, window_bounds = array<i64: 8, 128>}, {pipeline_mode = #tpu.pipeline_mode<synchronous>, transform_indices = @transform_1, window_bounds = array<i64: 128, 128>}, {pipeline_mode = #tpu.pipeline_mode<synchronous>, transform_indices = @transform_2, window_bounds = array<i64: 1, 128>}, {pipeline_mode = #tpu.pipeline_mode<synchronous>, transform_indices = @transform_3, window_bounds = array<i64: 128, 128>}, {pipeline_mode = #tpu.pipeline_mode<synchronous>, transform_indices = @transform_4, window_bounds = array<i64: 1, 128>}, {transform_indices = @transform_5, window_bounds = array<i64: 8, 128>}]} {
    %c0 = arith.constant 0 : index
    %c0_0 = arith.constant 0 : index
    %0 = vector.load %arg1[%c0, %c0_0] : memref<8x128xf32, #tpu.memory_space<vmem>>, vector<8x128xf32>
    %c0_1 = arith.constant 0 : index
    %c0_2 = arith.constant 0 : index
    %1 = vector.load %arg2[%c0_1, %c0_2] : memref<128x128xf32, #tpu.memory_space<vmem>>, vector<128x128xf32>
    %cst = arith.constant dense<0.000000e+00> : vector<8x128xf32>
    %2 = tpu.matmul %0, %1, %cst {dimension_numbers = #tpu.dot_dimension_numbers<[1], [0], [0], [1], [0, 0, 1, 1], [], []>} : vector<8x128xf32>, vector<128x128xf32>, vector<8x128xf32> -> vector<8x128xf32>
    %c0_3 = arith.constant 0 : index
    %c0_4 = arith.constant 0 : index
    %3 = vector.load %arg3[%c0_3, %c0_4] : memref<1x128xf32, #tpu.memory_space<vmem>>, vector<1x128xf32>
    %4 = vector.broadcast %3 : vector<1x128xf32> to vector<8x128xf32>
    %5 = arith.addf %2, %4 : vector<8x128xf32>
    %c0_5 = arith.constant 0 : index
    %c0_6 = arith.constant 0 : index
    %6 = vector.load %arg4[%c0_5, %c0_6] : memref<128x128xf32, #tpu.memory_space<vmem>>, vector<128x128xf32>
    %cst_7 = arith.constant dense<0.000000e+00> : vector<8x128xf32>
    %7 = tpu.matmul %5, %6, %cst_7 {dimension_numbers = #tpu.dot_dimension_numbers<[1], [0], [0], [1], [0, 0, 1, 1], [], []>} : vector<8x128xf32>, vector<128x128xf32>, vector<8x128xf32> -> vector<8x128xf32>
    %c0_8 = arith.constant 0 : index
    %c0_9 = arith.constant 0 : index
    %8 = vector.load %arg5[%c0_8, %c0_9] : memref<1x128xf32, #tpu.memory_space<vmem>>, vector<1x128xf32>
    %9 = vector.broadcast %8 : vector<1x128xf32> to vector<8x128xf32>
    %10 = arith.addf %7, %9 : vector<8x128xf32>
    %c0_10 = arith.constant 0 : index
    %c0_11 = arith.constant 0 : index
    %11 = vector.load %arg6[%c0_10, %c0_11] : memref<8x128xf32, #tpu.memory_space<vmem>>, vector<8x128xf32>
    tpu.vector_store %arg6[%c0_10, %c0_11], %10 {strides = array<i32>} : memref<8x128xf32, #tpu.memory_space<vmem>>, vector<8x128xf32>,
    return
  }
  func.func @transform_0(%arg0: i32) -> (i32, i32) {
    %c0_i32 = arith.constant 0 : i32
    %c0_i32_0 = arith.constant 0 : i32
    return %arg0, %c0_i32 : i32, i32
  }
  func.func @transform_1(%arg0: i32) -> (i32, i32) {
    %c0_i32 = arith.constant 0 : i32
    %c0_i32_0 = arith.constant 0 : i32
    %c0_i32_1 = arith.constant 0 : i32
    return %c0_i32, %c0_i32_0 : i32, i32
  }
  func.func @transform_2(%arg0: i32) -> (i32, i32) {
    %c0_i32 = arith.constant 0 : i32
    %c0_i32_0 = arith.constant 0 : i32
    %c0_i32_1 = arith.constant 0 : i32
    return %c0_i32, %c0_i32_0 : i32, i32
  }
  func.func @transform_3(%arg0: i32) -> (i32, i32) {
    %c0_i32 = arith.constant 0 : i32
    %c0_i32_0 = arith.constant 0 : i32
    %c0_i32_1 = arith.constant 0 : i32
    return %c0_i32, %c0_i32_0 : i32, i32
  }
  func.func @transform_4(%arg0: i32) -> (i32, i32) {
    %c0_i32 = arith.constant 0 : i32
    %c0_i32_0 = arith.constant 0 : i32
    %c0_i32_1 = arith.constant 0 : i32
    return %c0_i32, %c0_i32_0 : i32, i32
  }
  func.func @transform_5(%arg0: i32) -> (i32, i32) {
    %c0_i32 = arith.constant 0 : i32
    %c0_i32_0 = arith.constant 0 : i32
    return %arg0, %c0_i32 : i32, i32
  }
}

module attributes {stable_mosaic.version = 11 : i64} {
  func.func @_resident_kernel(%arg0: i32, %arg1: memref<8x128xf32, #tpu.memory_space<vmem>>, %arg2: memref<128x128xf32, #tpu.memory_space<vmem>>, %arg3: memref<1x128xf32, #tpu.memory_space<vmem>>, %arg4: memref<128x128xf32, #tpu.memory_space<vmem>>, %arg5: memref<1x128xf32, #tpu.memory_space<vmem>>, %arg6: memref<8x128xf32, #tpu.memory_space<vmem>>) attributes {dimension_semantics = [#tpu.dimension_semantics<parallel>], iteration_bounds = array<i64: 2>, scalar_prefetch = 0 : i64, scratch_operands = 0 : i64, tpu.core_type = #tpu.core_type<tc>, window_params = [{transform_indices = @transform_0, window_bounds = array<i64: 8, 128>}, {pipeline_mode = #tpu.pipeline_mode<synchronous>, transform_indices = @transform_1, window_bounds = array<i64: 128, 128>}, {pipeline_mode = #tpu.pipeline_mode<synchronous>, transform_indices = @transform_2, window_bounds = array<i64: 1, 128>}, {pipeline_mode = #tpu.pipeline_mode<synchronous>, transform_indices = @transform_3, window_bounds = array<i64: 128, 128>}, {pipeline_mode = #tpu.pipeline_mode<synchronous>, transform_indices = @transform_4, window_bounds = array<i64: 1, 128>}, {transform_indices = @transform_5, window_bounds = array<i64: 8, 128>}]} {
    %c0 = arith.constant 0 : index
    %c0_0 = arith.constant 0 : index
    %0 = vector.load %arg1[%c0, %c0_0] : memref<8x128xf32, #tpu.memory_space<vmem>>, vector<8x128xf32>
    %c0_1 = arith.constant 0 : index
    %c0_2 = arith.constant 0 : index
    %1 = vector.load %arg2[%c0_1, %c0_2] : memref<128x128xf32, #tpu.memory_space<vmem>>, vector<128x128xf32>
    %cst = arith.constant dense<0.000000e+00> : vector<8x128xf32>
    %2 = tpu.matmul %0, %1, %cst {dimension_numbers = #tpu.dot_dimension_numbers<[1], [0], [0], [1], [0, 0, 1, 1], [], []>} : vector<8x128xf32>, vector<128x128xf32>, vector<8x128xf32> -> vector<8x128xf32>
    %c0_3 = arith.constant 0 : index
    %c0_4 = arith.constant 0 : index
    %3 = vector.load %arg3[%c0_3, %c0_4] : memref<1x128xf32, #tpu.memory_space<vmem>>, vector<1x128xf32>
    %4 = vector.broadcast %3 : vector<1x128xf32> to vector<8x128xf32>
    %5 = arith.addf %2, %4 : vector<8x128xf32>
    %c0_5 = arith.constant 0 : index
    %c0_6 = arith.constant 0 : index
    %6 = vector.load %arg4[%c0_5, %c0_6] : memref<128x128xf32, #tpu.memory_space<vmem>>, vector<128x128xf32>
    %cst_7 = arith.constant dense<0.000000e+00> : vector<8x128xf32>
    %7 = tpu.matmul %5, %6, %cst_7 {dimension_numbers = #tpu.dot_dimension_numbers<[1], [0], [0], [1], [0, 0, 1, 1], [], []>} : vector<8x128xf32>, vector<128x128xf32>, vector<8x128xf32> -> vector<8x128xf32>
    %c0_8 = arith.constant 0 : index
    %c0_9 = arith.constant 0 : index
    %8 = vector.load %arg5[%c0_8, %c0_9] : memref<1x128xf32, #tpu.memory_space<vmem>>, vector<1x128xf32>
    %9 = vector.broadcast %8 : vector<1x128xf32> to vector<8x128xf32>
    %10 = arith.addf %7, %9 : vector<8x128xf32>
    %c0_10 = arith.constant 0 : index
    %c0_11 = arith.constant 0 : index
    %11 = vector.load %arg6[%c0_10, %c0_11] : memref<8x128xf32, #tpu.memory_space<vmem>>, vector<8x128xf32>
    tpu.vector_store %arg6[%c0_10, %c0_11], %10 {strides = array<i32>} : memref<8x128xf32, #tpu.memory_space<vmem>>, vector<8x128xf32>,
    return
  }
  func.func @transform_0(%arg0: i32) -> (i32, i32) {
    %c0_i32 = arith.constant 0 : i32
    %c0_i32_0 = arith.constant 0 : i32
    return %arg0, %c0_i32 : i32, i32
  }
  func.func @transform_1(%arg0: i32) -> (i32, i32) {
    %c0_i32 = arith.constant 0 : i32
    %c0_i32_0 = arith.constant 0 : i32
    %c0_i32_1 = arith.constant 0 : i32
    return %c0_i32, %c0_i32_0 : i32, i32
  }
  func.func @transform_2(%arg0: i32) -> (i32, i32) {
    %c0_i32 = arith.constant 0 : i32
    %c0_i32_0 = arith.constant 0 : i32
    %c0_i32_1 = arith.constant 0 : i32
    return %c0_i32, %c0_i32_0 : i32, i32
  }
  func.func @transform_3(%arg0: i32) -> (i32, i32) {
    %c0_i32 = arith.constant 0 : i32
    %c0_i32_0 = arith.constant 0 : i32
    %c0_i32_1 = arith.constant 0 : i32
    return %c0_i32, %c0_i32_0 : i32, i32
  }
  func.func @transform_4(%arg0: i32) -> (i32, i32) {
    %c0_i32 = arith.constant 0 : i32
    %c0_i32_0 = arith.constant 0 : i32
    %c0_i32_1 = arith.constant 0 : i32
    return %c0_i32, %c0_i32_0 : i32, i32
  }
  func.func @transform_5(%arg0: i32) -> (i32, i32) {
    %c0_i32 = arith.constant 0 : i32
    %c0_i32_0 = arith.constant 0 : i32
    return %arg0, %c0_i32 : i32, i32
  }
}

</mosaic_0001>

<llo_original>
// kernel: tpu_custom_call.1
$region0: #{tpu_custom_call.1}
  #allocation0 [shape = 'u32[]', space=smem, size = 0x4, offset = 0x4, fixed_abs, tag = 'smem constant byte address 0x4 - core index']
  #allocation1 [shape = 'u32[144,128]{1,0:T(1,128)}', space=vmem, size = 0x12000, scoped, tag = 'internal scratch']
  %s0 = inlined_call_operand.hbm [shape: f32[16,128], index: 0, kind: input, shape index: {}]
  %s1 = inlined_call_operand.hbm [shape: f32[128,128], index: 1, kind: input, shape index: {}]
  %s2 = inlined_call_operand.vmem [shape: f32[1,128], index: 2, kind: input, shape index: {}]
  %s3 = inlined_call_operand.hbm [shape: f32[128,128], index: 3, kind: input, shape index: {}]
  %s4 = inlined_call_operand.vmem [shape: f32[1,128], index: 4, kind: input, shape index: {}]
  %s5 = inlined_call_operand.hbm [shape: f32[16,128], index: 5, kind: output, shape index: {}]
  %s6 = sld [smem:[#allocation0]]
  $region65: #{tpu_custom_call.1} parent=0
    _
  %s8 = ssub.s32 1, %s6
  %s9 = scalar_select 0, %s8, %s6
  $region1: #{tpu_custom_call.1} parent=0
    #allocation2 [shape = 'u8[8192]{0}', space=vmem, size = 0x2000, scoped, tag = 'input window, operand 0']
    #allocation3 [shape = 's32[2]{0}', space=sflag, size = 0x8, scoped, tag = 'scoped memory for tpu_custom_call.1']
    #allocation4 [shape = 's32[2]{0}', space=sflag, size = 0x8, scoped, tag = 'scoped memory for tpu_custom_call.1']
    #allocation5 [shape = 'u8[65536]{0}', space=vmem, size = 0x10000, scoped, tag = 'input window, operand 1, single buffered']
    #allocation6 [shape = 's32[1]{0}', space=sflag, size = 0x4, scoped, tag = 'scoped memory for tpu_custom_call.1']
    #allocation7 [shape = 'u8[65536]{0}', space=vmem, size = 0x10000, scoped, tag = 'input window, operand 3, single buffered']
    #allocation8 [shape = 'u8[8192]{0}', space=vmem, size = 0x2000, scoped, tag = 'output window, operand 0']
    %10 = vsyncpa [#allocation3], 0
    %s11 = scalar_lea.sflag [#allocation3], 1
    %12 = vsyncpa %s11, 0
    %13 = vsyncpa [#allocation6], 0
    %14 = vsyncpa [#allocation4], 0
    %s15 = scalar_lea.sflag [#allocation4], 1
    %16 = vsyncpa %s15, 0
    loop: start=0, step=1, limit=4
    $region2: #{tpu_custom_call.1} parent=1 // loop_pre_header
      _
    $region3: #{tpu_custom_call.1} parent=1 // loop_header
      %s18 = sphi 0, %s22
      %p19 = scmp.ge.s32.totalorder %s18, 4
      %s28 = sphi 0, %s30
      %s31 = sphi 0, %s28
      %s32 = sphi 0, %s31
      %s48 = sphi 0, %s32
      %s52 = sphi 0, %s52
      %s54 = sphi 0, %s52
      %s55 = sphi 0, %s54
      %s69 = sphi 0, %s55
      %s73 = sphi 0, %s73
      %s75 = sphi 0, %s73
      %s76 = sphi 0, %s75
      %s90 = sphi 0, %s76
      %s94 = sphi 0, %s94
      %s96 = sphi 0, %s94
      %s97 = sphi 0, %s96
      %s111 = sphi 0, %s97
      %s115 = sphi 0, %s115
      %s117 = sphi 0, %s115
      %s118 = sphi 0, %s117
      %s132 = sphi 0, %s118
      %s138 = sphi 0, %s140
      %s141 = sphi 0, %s138
      %s142 = sphi 0, %s141
      %s158 = sphi 0, %s142
    $region4: #{tpu_custom_call.1} parent=1 // loop_header_branch
      %21 = sbr.rel (%p19) target = $region8
    $region5: #{tpu_custom_call.1} parent=1 // loop_body
      %s23 = ssub.s32 %s18, 1
      %s24 = ssub.s32 %s18, 2
      %s25 = sadd.s32 %s18, 1
      %s26 = ssub.s32 %s18, %s25
      %p27 = scmp.eq.s32.totalorder %s26, 0
      %s29 = sadd.s32 %s28, 1
      %s30 = scalar_select %p27, %s28, %s29
      %p33 = pneg %p27
      %p34 = scmp.eq.s32.totalorder %s18, 1
      %p35 = por %p33, %p34
      %p36 = scmp.ne.s32.totalorder %s28, %s31
      %p37 = scmp.eq.s32.totalorder %s18, 0
      %p38 = por %p36, %p37
      %p39 = scmp.ne.s32.totalorder %s28, %s31
      %p40 = scmp.eq.s32.totalorder %s23, 1
      %p41 = por %p39, %p40
      %p42 = scmp.ne.s32.totalorder %s31, %s32
      %p43 = scmp.eq.s32.totalorder %s23, 0
      %p44 = por %p42, %p43
      %p45 = scmp.ne.s32.totalorder %s31, %s32
      %p46 = scmp.eq.s32.totalorder %s24, 1
      %p47 = por %p45, %p46
      %p49 = scmp.ne.s32.totalorder %s32, %s48
      %p50 = scmp.eq.s32.totalorder %s24, 0
      %p51 = por %p49, %p50
      %s53 = sadd.s32 %s52, 1
      %p56 = scmp.eq.s32.totalorder %s18, 1
      %p57 = scmp.ne.s32.totalorder %s52, %s54
      %p58 = scmp.eq.s32.totalorder %s18, 0
      %p59 = por %p57, %p58
      %p60 = scmp.ne.s32.totalorder %s52, %s54
      %p61 = scmp.eq.s32.totalorder %s23, 1
      %p62 = por %p60, %p61
      %p63 = scmp.ne.s32.totalorder %s54, %s55
      %p64 = scmp.eq.s32.totalorder %s23, 0
      %p65 = por %p63, %p64
      %p66 = scmp.ne.s32.totalorder %s54, %s55
      %p67 = scmp.eq.s32.totalorder %s24, 1
      %p68 = por %p66, %p67
      %p70 = scmp.ne.s32.totalorder %s55, %s69
      %p71 = scmp.eq.s32.totalorder %s24, 0
      %p72 = por %p70, %p71
      %s74 = sadd.s32 %s73, 1
      %p77 = scmp.eq.s32.totalorder %s18, 1
      %p78 = scmp.ne.s32.totalorder %s73, %s75
      %p79 = scmp.eq.s32.totalorder %s18, 0
      %p80 = por %p78, %p79
      %p81 = scmp.ne.s32.totalorder %s73, %s75
      %p82 = scmp.eq.s32.totalorder %s23, 1
      %p83 = por %p81, %p82
      %p84 = scmp.ne.s32.totalorder %s75, %s76
      %p85 = scmp.eq.s32.totalorder %s23, 0
      %p86 = por %p84, %p85
      %p87 = scmp.ne.s32.totalorder %s75, %s76
      %p88 = scmp.eq.s32.totalorder %s24, 1
      %p89 = por %p87, %p88
      %p91 = scmp.ne.s32.totalorder %s76, %s90
      %p92 = scmp.eq.s32.totalorder %s24, 0
      %p93 = por %p91, %p92
      %s95 = sadd.s32 %s94, 1
      %p98 = scmp.eq.s32.totalorder %s18, 1
      %p99 = scmp.ne.s32.totalorder %s94, %s96
      %p100 = scmp.eq.s32.totalorder %s18, 0
      %p101 = por %p99, %p100
      %p102 = scmp.ne.s32.totalorder %s94, %s96
      %p103 = scmp.eq.s32.totalorder %s23, 1
      %p104 = por %p102, %p103
      %p105 = scmp.ne.s32.totalorder %s96, %s97
      %p106 = scmp.eq.s32.totalorder %s23, 0
      %p107 = por %p105, %p106
      %p108 = scmp.ne.s32.totalorder %s96, %s97
      %p109 = scmp.eq.s32.totalorder %s24, 1
      %p110 = por %p108, %p109
      %p112 = scmp.ne.s32.totalorder %s97, %s111
      %p113 = scmp.eq.s32.totalorder %s24, 0
      %p114 = por %p112, %p113
      %s116 = sadd.s32 %s115, 1
      %p119 = scmp.eq.s32.totalorder %s18, 1
      %p120 = scmp.ne.s32.totalorder %s115, %s117
      %p121 = scmp.eq.s32.totalorder %s18, 0
      %p122 = por %p120, %p121
      %p123 = scmp.ne.s32.totalorder %s115, %s117
      %p124 = scmp.eq.s32.totalorder %s23, 1
      %p125 = por %p123, %p124
      %p126 = scmp.ne.s32.totalorder %s117, %s118
      %p127 = scmp.eq.s32.totalorder %s23, 0
      %p128 = por %p126, %p127
      %p129 = scmp.ne.s32.totalorder %s117, %s118
      %p130 = scmp.eq.s32.totalorder %s24, 1
      %p131 = por %p129, %p130
      %p133 = scmp.ne.s32.totalorder %s118, %s132
      %p134 = scmp.eq.s32.totalorder %s24, 0
      %p135 = por %p133, %p134
      %s136 = ssub.s32 %s18, %s25
      %p137 = scmp.eq.s32.totalorder %s136, 0
      %s139 = sadd.s32 %s138, 1
      %s140 = scalar_select %p137, %s138, %s139
      %p143 = pneg %p137
      %p144 = scmp.eq.s32.totalorder %s18, 1
      %p145 = por %p143, %p144
      %p146 = scmp.ne.s32.totalorder %s138, %s141
      %p147 = scmp.eq.s32.totalorder %s18, 0
      %p148 = por %p146, %p147
      %p149 = scmp.ne.s32.totalorder %s138, %s141
      %p150 = scmp.eq.s32.totalorder %s23, 1
      %p151 = por %p149, %p150
      %p152 = scmp.ne.s32.totalorder %s141, %s142
      %p153 = scmp.eq.s32.totalorder %s23, 0
      %p154 = por %p152, %p153
      %p155 = scmp.ne.s32.totalorder %s141, %s142
      %p156 = scmp.eq.s32.totalorder %s24, 1
      %p157 = por %p155, %p156
      %p159 = scmp.ne.s32.totalorder %s142, %s158
      %p160 = scmp.eq.s32.totalorder %s24, 0
      %p161 = por %p159, %p160
      %p162 = scmp.le.s32.totalorder 1, %s18
      %p163 = scmp.lt.s32.totalorder %s18, 3
      %p164 = pnand %p162, %p163
      %p165 = pneg %p164
      // Predicated region
      $region9: #{tpu_custom_call.1} parent=5 // pred_check
        _
      $region10: #{tpu_custom_call.1} parent=5 // pred_check_branch
        %167 = sbr.rel (%p164) target = $region12
      $region11: #{tpu_custom_call.1} parent=5 // pred_region
        %s168 = ssub.s32 %s18, 1
        // Predicated region
        $region13: #{tpu_custom_call.1} parent=11 // pred_check
          %p169 = pneg %p65
        $region14: #{tpu_custom_call.1} parent=11 // pred_check_branch
          %171 = sbr.rel (%p169) target = $region16
        $region15: #{tpu_custom_call.1} parent=11 // pred_region
          %s173 = ssub.s32 2048, 2048
          %174 = vsyncadd [#allocation6], %s173
          %s175 = sshll.u32 [#allocation5], 4
          %s176 = int_to_ptr.vmem [resolvable:$true] %s175
          %181 = dma.hbm_to_vmem [thread:$0]  %s1, 2048, %s176, [#allocation6], 128, 128, 8
        $region16: #{tpu_custom_call.1} parent=11 // pred_fallthru
          _
        // Predicated region
        $region17: #{tpu_custom_call.1} parent=11 // pred_check
          %p182 = pneg %p86
        $region18: #{tpu_custom_call.1} parent=11 // pred_check_branch
          %184 = sbr.rel (%p182) target = $region20
        $region19: #{tpu_custom_call.1} parent=11 // pred_region
          _
        $region20: #{tpu_custom_call.1} parent=11 // pred_fallthru
          _
        // Predicated region
        $region21: #{tpu_custom_call.1} parent=11 // pred_check
          %p185 = pneg %p107
        $region22: #{tpu_custom_call.1} parent=11 // pred_check_branch
          %187 = sbr.rel (%p185) target = $region24
        $region23: #{tpu_custom_call.1} parent=11 // pred_region
          %s189 = ssub.s32 2048, 2048
          %190 = vsyncadd [#allocation6], %s189
          %s191 = sshll.u32 [#allocation7], 4
          %s192 = int_to_ptr.vmem [resolvable:$true] %s191
          %197 = dma.hbm_to_vmem [thread:$0]  %s3, 2048, %s192, [#allocation6], 128, 128, 8
        $region24: #{tpu_custom_call.1} parent=11 // pred_fallthru
          _
        // Predicated region
        $region25: #{tpu_custom_call.1} parent=11 // pred_check
          %p198 = pneg %p128
        $region26: #{tpu_custom_call.1} parent=11 // pred_check_branch
          %200 = sbr.rel (%p198) target = $region28
        $region27: #{tpu_custom_call.1} parent=11 // pred_region
          _
        $region28: #{tpu_custom_call.1} parent=11 // pred_fallthru
          _
      $region12: #{tpu_custom_call.1} parent=5 // pred_fallthru
        _
      %p201 = scmp.lt.s32.totalorder %s18, 2
      // Predicated region
      $region29: #{tpu_custom_call.1} parent=5 // pred_check
        %p202 = pneg %p201
      $region30: #{tpu_custom_call.1} parent=5 // pred_check_branch
        %204 = sbr.rel (%p202) target = $region32
      $region31: #{tpu_custom_call.1} parent=5 // pred_region
        // Predicated region
        $region33: #{tpu_custom_call.1} parent=31 // pred_check
          %p205 = pneg %p38
        $region34: #{tpu_custom_call.1} parent=31 // pred_check_branch
          %207 = sbr.rel (%p205) target = $region36
        $region35: #{tpu_custom_call.1} parent=31 // pred_region
          %s208 = sand.u32 %s28, 1
          %s209 = scalar_lea.sflag [#allocation3], %s208
          %s210 = sand.u32 %s28, 1
          %s211 = smul.addr %s210, 8
          %s212 = scalar_lea.vmem [#allocation2], %s211
          %s214 = ssub.s32 128, 128
          %215 = vsyncadd %s209, %s214
          %s216 = smul.addr %s18, 128
          %s217 = scalar_lea.hbm %s0, %s216
          %s219 = sshll.u32 %s212, 4
          %s220 = int_to_ptr.vmem [resolvable:$true] %s219
          %222 = dma.hbm_to_vmem [thread:$0]  %s217, 128, %s220, %s209
        $region36: #{tpu_custom_call.1} parent=31 // pred_fallthru
          _
      $region32: #{tpu_custom_call.1} parent=5 // pred_fallthru
        _
      %p223 = scmp.le.s32.totalorder 1, %s18
      %p224 = scmp.lt.s32.totalorder %s18, 3
      %p225 = pnand %p223, %p224
      %p226 = pneg %p225
      // Predicated region
      $region37: #{tpu_custom_call.1} parent=5 // pred_check
        _
      $region38: #{tpu_custom_call.1} parent=5 // pred_check_branch
        %228 = sbr.rel (%p225) target = $region40
      $region39: #{tpu_custom_call.1} parent=5 // pred_region
        %s229 = ssub.s32 %s18, 1
        %s230 = sand.u32 %s31, 1
        %s231 = scalar_lea.sflag [#allocation3], %s230
        %s232 = sand.u32 %s31, 1
        %s233 = smul.addr %s232, 8
        %s234 = scalar_lea.vmem [#allocation2], %s233
        // Predicated region
        $region41: #{tpu_custom_call.1} parent=39 // pred_check
          %p235 = pneg %p44
        $region42: #{tpu_custom_call.1} parent=39 // pred_check_branch
          %237 = sbr.rel (%p235) target = $region44
        $region43: #{tpu_custom_call.1} parent=39 // pred_region
          %238 = dma.done %s231, 128
        $region44: #{tpu_custom_call.1} parent=39 // pred_fallthru
          _
        // Predicated region
        $region45: #{tpu_custom_call.1} parent=39 // pred_check
          %p239 = pneg %p65
        $region46: #{tpu_custom_call.1} parent=39 // pred_check_branch
          %241 = sbr.rel (%p239) target = $region48
        $region47: #{tpu_custom_call.1} parent=39 // pred_region
          %242 = dma.done [#allocation6], 2048
        $region48: #{tpu_custom_call.1} parent=39 // pred_fallthru
          _
        // Predicated region
        $region49: #{tpu_custom_call.1} parent=39 // pred_check
          %p243 = pneg %p107
        $region50: #{tpu_custom_call.1} parent=39 // pred_check_branch
          %245 = sbr.rel (%p243) target = $region52
        $region51: #{tpu_custom_call.1} parent=39 // pred_region
          %246 = dma.done [#allocation6], 2048
        $region52: #{tpu_custom_call.1} parent=39 // pred_fallthru
          _
        %s247 = sand.u32 %s31, 1
        %s248 = scalar_lea.sflag [#allocation3], %s247
        %s249 = sand.u32 %s31, 1
        %s250 = smul.addr %s249, 8
        %s251 = scalar_lea.vmem [#allocation2], %s250
        %p252 = pneg %p44
        %p253 = pneg %p41
        %p254 = pneg %p65
        %p255 = pneg %p62
        %p256 = pneg %p86
        %p257 = pneg %p83
        %p258 = pneg %p107
        %p259 = pneg %p104
        %p260 = pneg %p128
        %p261 = pneg %p125
        %p262 = pneg %p154
        %p263 = pneg %p151
        %s264 = sand.u32 %s141, 1
        %s265 = scalar_lea.sflag [#allocation4], %s264
        %s266 = sand.u32 %s141, 1
        %s267 = smul.addr %s266, 8
        %s268 = scalar_lea.vmem [#allocation8], %s267
        %v269 = vld [vmem:[%s234] sm:$0xff]
        %v270 = vld [vmem:[#allocation5] sm:$0xff]
        %v271 = vld [vmem:[#allocation5 + $0x8] sm:$0xff]
        %v272 = vld [vmem:[#allocation5 + $0x10] sm:$0xff]
        %v273 = vld [vmem:[#allocation5 + $0x18] sm:$0xff]
        %v274 = vld [vmem:[#allocation5 + $0x20] sm:$0xff]
        %v275 = vld [vmem:[#allocation5 + $0x28] sm:$0xff]
        %v276 = vld [vmem:[#allocation5 + $0x30] sm:$0xff]
        %v277 = vld [vmem:[#allocation5 + $0x38] sm:$0xff]
        %v278 = vld [vmem:[#allocation5 + $0x40] sm:$0xff]
        %v279 = vld [vmem:[#allocation5 + $0x48] sm:$0xff]
        %v280 = vld [vmem:[#allocation5 + $0x50] sm:$0xff]
        %v281 = vld [vmem:[#allocation5 + $0x58] sm:$0xff]
        %v282 = vld [vmem:[#allocation5 + $0x60] sm:$0xff]
        %v283 = vld [vmem:[#allocation5 + $0x68] sm:$0xff]
        %v284 = vld [vmem:[#allocation5 + $0x70] sm:$0xff]
        %v285 = vld [vmem:[#allocation5 + $0x78] sm:$0xff]
        %v286 = vld [vmem:[%s2] sm:$0x1]
        %v288 = vlaneseq
        %v289 = vshrl.u32 %v288, 7
        %v290 = vsub.s32 0, %v289
        %v291 = vrot.slane %v286, %v290
        %293 = vmatprep.subr.mxu0 0.0
        %294 = vmatpush1.msra.mxu0 %v285
        %295 = vmatprep.subr.mxu0 0.0
        %296 = vmatpush1.msra.mxu0 %v284
        %297 = vmatprep.subr.mxu0 0.0
        %298 = vmatpush1.msra.mxu0 %v283
        %299 = vmatprep.subr.mxu0 0.0
        %300 = vmatpush1.msra.mxu0 %v282
        %301 = vmatprep.subr.mxu0 0.0
        %302 = vmatpush1.msra.mxu0 %v281
        %303 = vmatprep.subr.mxu0 0.0
        %304 = vmatpush1.msra.mxu0 %v280
        %305 = vmatprep.subr.mxu0 0.0
        %306 = vmatpush1.msra.mxu0 %v279
        %307 = vmatprep.subr.mxu0 0.0
        %308 = vmatpush1.msra.mxu0 %v278
        %309 = vmatprep.subr.mxu0 0.0
        %310 = vmatpush1.msra.mxu0 %v277
        %311 = vmatprep.subr.mxu0 0.0
        %312 = vmatpush1.msra.mxu0 %v276
        %313 = vmatprep.subr.mxu0 0.0
        %314 = vmatpush1.msra.mxu0 %v275
        %315 = vmatprep.subr.mxu0 0.0
        %316 = vmatpush1.msra.mxu0 %v274
        %317 = vmatprep.subr.mxu0 0.0
        %318 = vmatpush1.msra.mxu0 %v273
        %319 = vmatprep.subr.mxu0 0.0
        %320 = vmatpush1.msra.mxu0 %v272
        %321 = vmatprep.subr.mxu0 0.0
        %322 = vmatpush1.msra.mxu0 %v271
        %323 = vmatprep.subr.mxu0 0.0
        %324 = vmatpush1.msra.mxu0 %v270
        %325 = vmatprep.subr.mxu0 0.0
        %326 = vmatpush2.msra.mxu0 0.0
        %327 = vmatprep.subr.mxu0 0.0
        %328 = vmatpush2.msra.mxu0 0.0
        %329 = vmatprep.subr.mxu0 0.0
        %330 = vmatpush2.msra.mxu0 0.0
        %331 = vmatprep.subr.mxu0 0.0
        %332 = vmatpush2.msra.mxu0 0.0
        %333 = vmatprep.subr.mxu0 0.0
        %334 = vmatpush2.msra.mxu0 0.0
        %335 = vmatprep.subr.mxu0 0.0
        %336 = vmatpush2.msra.mxu0 0.0
        %337 = vmatprep.subr.mxu0 0.0
        %338 = vmatpush2.msra.mxu0 0.0
        %339 = vmatprep.subr.mxu0 0.0
        %340 = vmatpush2.msra.mxu0 0.0
        %341 = vmatprep.subr.mxu0 0.0
        %342 = vmatpush2.msra.mxu0 0.0
        %343 = vmatprep.subr.mxu0 0.0
        %344 = vmatpush2.msra.mxu0 0.0
        %345 = vmatprep.subr.mxu0 0.0
        %346 = vmatpush2.msra.mxu0 0.0
        %347 = vmatprep.subr.mxu0 0.0
        %348 = vmatpush2.msra.mxu0 0.0
        %349 = vmatprep.subr.mxu0 0.0
        %350 = vmatpush2.msra.mxu0 0.0
        %351 = vmatprep.subr.mxu0 0.0
        %352 = vmatpush2.msra.mxu0 0.0
        %353 = vmatprep.subr.mxu0 0.0
        %354 = vmatpush2.msra.mxu0 0.0
        %355 = vmatprep.subr.mxu0 0.0
        %356 = vmatpush2.msra.mxu0 0.0
        %357 = vmatprep.mubr.f32.mxu0 0.0
        %358 = vmatmul.mubr.f32.gmra.mxu0 %v269
        %v359 = vpop.f32.mrf.mxu0
        %v360 = vadd.f32 %v291, %v359
        %v361 = vpop.f32.mrf.mxu0
        %362 = vdwg.mxu0
        %v363 = vld [vmem:[#allocation7] sm:$0xff]
        %v364 = vld [vmem:[#allocation7 + $0x8] sm:$0xff]
        %v365 = vld [vmem:[#allocation7 + $0x10] sm:$0xff]
        %v366 = vld [vmem:[#allocation7 + $0x18] sm:$0xff]
        %v367 = vld [vmem:[#allocation7 + $0x20] sm:$0xff]
        %v368 = vld [vmem:[#allocation7 + $0x28] sm:$0xff]
        %v369 = vld [vmem:[#allocation7 + $0x30] sm:$0xff]
        %v370 = vld [vmem:[#allocation7 + $0x38] sm:$0xff]
        %v371 = vld [vmem:[#allocation7 + $0x40] sm:$0xff]
        %v372 = vld [vmem:[#allocation7 + $0x48] sm:$0xff]
        %v373 = vld [vmem:[#allocation7 + $0x50] sm:$0xff]
        %v374 = vld [vmem:[#allocation7 + $0x58] sm:$0xff]
        %v375 = vld [vmem:[#allocation7 + $0x60] sm:$0xff]
        %v376 = vld [vmem:[#allocation7 + $0x68] sm:$0xff]
        %v377 = vld [vmem:[#allocation7 + $0x70] sm:$0xff]
        %v378 = vld [vmem:[#allocation7 + $0x78] sm:$0xff]
        %v379 = vld [vmem:[%s4] sm:$0x1]
        %v381 = vlaneseq
        %v382 = vshrl.u32 %v381, 7
        %v383 = vsub.s32 0, %v382
        %v384 = vrot.slane %v379, %v383
        %386 = vmatprep.subr.mxu0 0.0
        %387 = vmatpush1.msra.mxu0 %v378
        %388 = vmatprep.subr.mxu0 0.0
        %389 = vmatpush1.msra.mxu0 %v377
        %390 = vmatprep.subr.mxu0 0.0
        %391 = vmatpush1.msra.mxu0 %v376
        %392 = vmatprep.subr.mxu0 0.0
        %393 = vmatpush1.msra.mxu0 %v375
        %394 = vmatprep.subr.mxu0 0.0
        %395 = vmatpush1.msra.mxu0 %v374
        %396 = vmatprep.subr.mxu0 0.0
        %397 = vmatpush1.msra.mxu0 %v373
        %398 = vmatprep.subr.mxu0 0.0
        %399 = vmatpush1.msra.mxu0 %v372
        %400 = vmatprep.subr.mxu0 0.0
        %401 = vmatpush1.msra.mxu0 %v371
        %402 = vmatprep.subr.mxu0 0.0
        %403 = vmatpush1.msra.mxu0 %v370
        %404 = vmatprep.subr.mxu0 0.0
        %405 = vmatpush1.msra.mxu0 %v369
        %406 = vmatprep.subr.mxu0 0.0
        %407 = vmatpush1.msra.mxu0 %v368
        %408 = vmatprep.subr.mxu0 0.0
        %409 = vmatpush1.msra.mxu0 %v367
        %410 = vmatprep.subr.mxu0 0.0
        %411 = vmatpush1.msra.mxu0 %v366
        %412 = vmatprep.subr.mxu0 0.0
        %413 = vmatpush1.msra.mxu0 %v365
        %414 = vmatprep.subr.mxu0 0.0
        %415 = vmatpush1.msra.mxu0 %v364
        %416 = vmatprep.subr.mxu0 0.0
        %417 = vmatpush1.msra.mxu0 %v363
        %418 = vmatprep.subr.mxu0 0.0
        %419 = vmatpush2.msra.mxu0 0.0
        %420 = vmatprep.subr.mxu0 0.0
        %421 = vmatpush2.msra.mxu0 0.0
        %422 = vmatprep.subr.mxu0 0.0
        %423 = vmatpush2.msra.mxu0 0.0
        %424 = vmatprep.subr.mxu0 0.0
        %425 = vmatpush2.msra.mxu0 0.0
        %426 = vmatprep.subr.mxu0 0.0
        %427 = vmatpush2.msra.mxu0 0.0
        %428 = vmatprep.subr.mxu0 0.0
        %429 = vmatpush2.msra.mxu0 0.0
        %430 = vmatprep.subr.mxu0 0.0
        %431 = vmatpush2.msra.mxu0 0.0
        %432 = vmatprep.subr.mxu0 0.0
        %433 = vmatpush2.msra.mxu0 0.0
        %434 = vmatprep.subr.mxu0 0.0
        %435 = vmatpush2.msra.mxu0 0.0
        %436 = vmatprep.subr.mxu0 0.0
        %437 = vmatpush2.msra.mxu0 0.0
        %438 = vmatprep.subr.mxu0 0.0
        %439 = vmatpush2.msra.mxu0 0.0
        %440 = vmatprep.subr.mxu0 0.0
        %441 = vmatpush2.msra.mxu0 0.0
        %442 = vmatprep.subr.mxu0 0.0
        %443 = vmatpush2.msra.mxu0 0.0
        %444 = vmatprep.subr.mxu0 0.0
        %445 = vmatpush2.msra.mxu0 0.0
        %446 = vmatprep.subr.mxu0 0.0
        %447 = vmatpush2.msra.mxu0 0.0
        %448 = vmatprep.subr.mxu0 0.0
        %449 = vmatpush2.msra.mxu0 0.0
        %450 = vmatprep.mubr.f32.mxu0 0.0
        %451 = vmatmul.mubr.f32.gmra.mxu0 %v360
        %v452 = vpop.f32.mrf.mxu0
        %v453 = vadd.f32 %v384, %v452
        %v454 = vpop.f32.mrf.mxu0
        %455 = vdwg.mxu0
        %456 = vst [vmem:[%s268] sm:$0xff] %v453
        %s457 = sand.u32 %s141, 1
        %s458 = scalar_lea.sflag [#allocation4], %s457
        %s459 = sand.u32 %s141, 1
        %s460 = smul.addr %s459, 8
        %s461 = scalar_lea.vmem [#allocation8], %s460
        // Predicated region
        $region53: #{tpu_custom_call.1} parent=39 // pred_check
          %p462 = pneg %p151
        $region54: #{tpu_custom_call.1} parent=39 // pred_check_branch
          %464 = sbr.rel (%p462) target = $region56
        $region55: #{tpu_custom_call.1} parent=39 // pred_region
          %s466 = ssub.s32 128, 128
          %467 = vsyncadd %s458, %s466
          %s468 = smul.addr %s23, 128
          %s469 = scalar_lea.hbm %s5, %s468
          %s471 = sshll.u32 %s461, 4
          %s472 = int_to_ptr.vmem [resolvable:$true] %s471
          %474 = dma.vmem_to_hbm [thread:$0]  %s472, 128, %s469, %s458
        $region56: #{tpu_custom_call.1} parent=39 // pred_fallthru
          _
      $region40: #{tpu_custom_call.1} parent=5 // pred_fallthru
        _
      %p475 = scmp.le.s32.totalorder 2, %s18
      // Predicated region
      $region57: #{tpu_custom_call.1} parent=5 // pred_check
        %p476 = pneg %p475
      $region58: #{tpu_custom_call.1} parent=5 // pred_check_branch
        %478 = sbr.rel (%p476) target = $region60
      $region59: #{tpu_custom_call.1} parent=5 // pred_region
        %s479 = ssub.s32 %s18, 2
        // Predicated region
        $region61: #{tpu_custom_call.1} parent=59 // pred_check
          %p480 = pneg %p157
        $region62: #{tpu_custom_call.1} parent=59 // pred_check_branch
          %482 = sbr.rel (%p480) target = $region64
        $region63: #{tpu_custom_call.1} parent=59 // pred_region
          %s483 = sand.u32 %s142, 1
          %s484 = scalar_lea.sflag [#allocation4], %s483
          %s485 = sand.u32 %s142, 1
          %s486 = smul.addr %s485, 8
          %s487 = scalar_lea.vmem [#allocation8], %s486
          %488 = dma.done %s484, 128
        $region64: #{tpu_custom_call.1} parent=59 // pred_fallthru
          _
      $region60: #{tpu_custom_call.1} parent=5 // pred_fallthru
        _
    $region6: #{tpu_custom_call.1} parent=1 // loop_footer
      %s22 = sadd.s32 1, %s18
    $region7: #{tpu_custom_call.1} parent=1 // loop_footer_branch
      %17 = sbr.rel target = $region3
    $region8: #{tpu_custom_call.1} parent=1 // loop_exit
      _
    %489 = vsyncpa [#allocation3], 1
    %s490 = scalar_lea.sflag [#allocation3], 1
    %491 = vsyncpa %s490, 1
    %492 = vsyncpa [#allocation6], 1
    %493 = vsyncpa [#allocation4], 1
    %s494 = scalar_lea.sflag [#allocation4], 1
    %495 = vsyncpa %s494, 1

// kernel: tpu_custom_call.1
$region0: #{tpu_custom_call.1}
  #allocation0 [shape = 'u32[]', space=smem, size = 0x4, offset = 0x4, fixed_abs, tag = 'smem constant byte address 0x4 - core index']
  #allocation1 [shape = 'u32[144,128]{1,0:T(1,128)}', space=vmem, size = 0x12000, scoped, tag = 'internal scratch']
  %s0 = inlined_call_operand.hbm [shape: f32[16,128], index: 0, kind: input, shape index: {}]
  %s1 = inlined_call_operand.hbm [shape: f32[128,128], index: 1, kind: input, shape index: {}]
  %s2 = inlined_call_operand.vmem [shape: f32[1,128], index: 2, kind: input, shape index: {}]
  %s3 = inlined_call_operand.hbm [shape: f32[128,128], index: 3, kind: input, shape index: {}]
  %s4 = inlined_call_operand.vmem [shape: f32[1,128], index: 4, kind: input, shape index: {}]
  %s5 = inlined_call_operand.hbm [shape: f32[16,128], index: 5, kind: output, shape index: {}]
  %s6 = sld [smem:[#allocation0]]
  $region65: #{tpu_custom_call.1} parent=0
    _
  %s8 = ssub.s32 1, %s6
  %s9 = scalar_select 0, %s8, %s6
  $region1: #{tpu_custom_call.1} parent=0
    #allocation2 [shape = 'u8[8192]{0}', space=vmem, size = 0x2000, scoped, tag = 'input window, operand 0']
    #allocation3 [shape = 's32[2]{0}', space=sflag, size = 0x8, scoped, tag = 'scoped memory for tpu_custom_call.1']
    #allocation4 [shape = 's32[2]{0}', space=sflag, size = 0x8, scoped, tag = 'scoped memory for tpu_custom_call.1']
    #allocation5 [shape = 'u8[65536]{0}', space=vmem, size = 0x10000, scoped, tag = 'input window, operand 1, single buffered']
    #allocation6 [shape = 's32[1]{0}', space=sflag, size = 0x4, scoped, tag = 'scoped memory for tpu_custom_call.1']
    #allocation7 [shape = 'u8[65536]{0}', space=vmem, size = 0x10000, scoped, tag = 'input window, operand 3, single buffered']
    #allocation8 [shape = 'u8[8192]{0}', space=vmem, size = 0x2000, scoped, tag = 'output window, operand 0']
    %10 = vsyncpa [#allocation3], 0
    %s11 = scalar_lea.sflag [#allocation3], 1
    %12 = vsyncpa %s11, 0
    %13 = vsyncpa [#allocation6], 0
    %14 = vsyncpa [#allocation4], 0
    %s15 = scalar_lea.sflag [#allocation4], 1
    %16 = vsyncpa %s15, 0
    loop: start=0, step=1, limit=4
    $region2: #{tpu_custom_call.1} parent=1 // loop_pre_header
      _
    $region3: #{tpu_custom_call.1} parent=1 // loop_header
      %s18 = sphi 0, %s22
      %p19 = scmp.ge.s32.totalorder %s18, 4
      %s28 = sphi 0, %s30
      %s31 = sphi 0, %s28
      %s32 = sphi 0, %s31
      %s48 = sphi 0, %s32
      %s52 = sphi 0, %s52
      %s54 = sphi 0, %s52
      %s55 = sphi 0, %s54
      %s69 = sphi 0, %s55
      %s73 = sphi 0, %s73
      %s75 = sphi 0, %s73
      %s76 = sphi 0, %s75
      %s90 = sphi 0, %s76
      %s94 = sphi 0, %s94
      %s96 = sphi 0, %s94
      %s97 = sphi 0, %s96
      %s111 = sphi 0, %s97
      %s115 = sphi 0, %s115
      %s117 = sphi 0, %s115
      %s118 = sphi 0, %s117
      %s132 = sphi 0, %s118
      %s138 = sphi 0, %s140
      %s141 = sphi 0, %s138
      %s142 = sphi 0, %s141
      %s158 = sphi 0, %s142
    $region4: #{tpu_custom_call.1} parent=1 // loop_header_branch
      %21 = sbr.rel (%p19) target = $region8
    $region5: #{tpu_custom_call.1} parent=1 // loop_body
      %s23 = ssub.s32 %s18, 1
      %s24 = ssub.s32 %s18, 2
      %s25 = sadd.s32 %s18, 1
      %s26 = ssub.s32 %s18, %s25
      %p27 = scmp.eq.s32.totalorder %s26, 0
      %s29 = sadd.s32 %s28, 1
      %s30 = scalar_select %p27, %s28, %s29
      %p33 = pneg %p27
      %p34 = scmp.eq.s32.totalorder %s18, 1
      %p35 = por %p33, %p34
      %p36 = scmp.ne.s32.totalorder %s28, %s31
      %p37 = scmp.eq.s32.totalorder %s18, 0
      %p38 = por %p36, %p37
      %p39 = scmp.ne.s32.totalorder %s28, %s31
      %p40 = scmp.eq.s32.totalorder %s23, 1
      %p41 = por %p39, %p40
      %p42 = scmp.ne.s32.totalorder %s31, %s32
      %p43 = scmp.eq.s32.totalorder %s23, 0
      %p44 = por %p42, %p43
      %p45 = scmp.ne.s32.totalorder %s31, %s32
      %p46 = scmp.eq.s32.totalorder %s24, 1
      %p47 = por %p45, %p46
      %p49 = scmp.ne.s32.totalorder %s32, %s48
      %p50 = scmp.eq.s32.totalorder %s24, 0
      %p51 = por %p49, %p50
      %s53 = sadd.s32 %s52, 1
      %p56 = scmp.eq.s32.totalorder %s18, 1
      %p57 = scmp.ne.s32.totalorder %s52, %s54
      %p58 = scmp.eq.s32.totalorder %s18, 0
      %p59 = por %p57, %p58
      %p60 = scmp.ne.s32.totalorder %s52, %s54
      %p61 = scmp.eq.s32.totalorder %s23, 1
      %p62 = por %p60, %p61
      %p63 = scmp.ne.s32.totalorder %s54, %s55
      %p64 = scmp.eq.s32.totalorder %s23, 0
      %p65 = por %p63, %p64
      %p66 = scmp.ne.s32.totalorder %s54, %s55
      %p67 = scmp.eq.s32.totalorder %s24, 1
      %p68 = por %p66, %p67
      %p70 = scmp.ne.s32.totalorder %s55, %s69
      %p71 = scmp.eq.s32.totalorder %s24, 0
      %p72 = por %p70, %p71
      %s74 = sadd.s32 %s73, 1
      %p77 = scmp.eq.s32.totalorder %s18, 1
      %p78 = scmp.ne.s32.totalorder %s73, %s75
      %p79 = scmp.eq.s32.totalorder %s18, 0
      %p80 = por %p78, %p79
      %p81 = scmp.ne.s32.totalorder %s73, %s75
      %p82 = scmp.eq.s32.totalorder %s23, 1
      %p83 = por %p81, %p82
      %p84 = scmp.ne.s32.totalorder %s75, %s76
      %p85 = scmp.eq.s32.totalorder %s23, 0
      %p86 = por %p84, %p85
      %p87 = scmp.ne.s32.totalorder %s75, %s76
      %p88 = scmp.eq.s32.totalorder %s24, 1
      %p89 = por %p87, %p88
      %p91 = scmp.ne.s32.totalorder %s76, %s90
      %p92 = scmp.eq.s32.totalorder %s24, 0
      %p93 = por %p91, %p92
      %s95 = sadd.s32 %s94, 1
      %p98 = scmp.eq.s32.totalorder %s18, 1
      %p99 = scmp.ne.s32.totalorder %s94, %s96
      %p100 = scmp.eq.s32.totalorder %s18, 0
      %p101 = por %p99, %p100
      %p102 = scmp.ne.s32.totalorder %s94, %s96
      %p103 = scmp.eq.s32.totalorder %s23, 1
      %p104 = por %p102, %p103
      %p105 = scmp.ne.s32.totalorder %s96, %s97
      %p106 = scmp.eq.s32.totalorder %s23, 0
      %p107 = por %p105, %p106
      %p108 = scmp.ne.s32.totalorder %s96, %s97
      %p109 = scmp.eq.s32.totalorder %s24, 1
      %p110 = por %p108, %p109
      %p112 = scmp.ne.s32.totalorder %s97, %s111
      %p113 = scmp.eq.s32.totalorder %s24, 0
      %p114 = por %p112, %p113
      %s116 = sadd.s32 %s115, 1
      %p119 = scmp.eq.s32.totalorder %s18, 1
      %p120 = scmp.ne.s32.totalorder %s115, %s117
      %p121 = scmp.eq.s32.totalorder %s18, 0
      %p122 = por %p120, %p121
      %p123 = scmp.ne.s32.totalorder %s115, %s117
      %p124 = scmp.eq.s32.totalorder %s23, 1
      %p125 = por %p123, %p124
      %p126 = scmp.ne.s32.totalorder %s117, %s118
      %p127 = scmp.eq.s32.totalorder %s23, 0
      %p128 = por %p126, %p127
      %p129 = scmp.ne.s32.totalorder %s117, %s118
      %p130 = scmp.eq.s32.totalorder %s24, 1
      %p131 = por %p129, %p130
      %p133 = scmp.ne.s32.totalorder %s118, %s132
      %p134 = scmp.eq.s32.totalorder %s24, 0
      %p135 = por %p133, %p134
      %s136 = ssub.s32 %s18, %s25
      %p137 = scmp.eq.s32.totalorder %s136, 0
      %s139 = sadd.s32 %s138, 1
      %s140 = scalar_select %p137, %s138, %s139
      %p143 = pneg %p137
      %p144 = scmp.eq.s32.totalorder %s18, 1
      %p145 = por %p143, %p144
      %p146 = scmp.ne.s32.totalorder %s138, %s141
      %p147 = scmp.eq.s32.totalorder %s18, 0
      %p148 = por %p146, %p147
      %p149 = scmp.ne.s32.totalorder %s138, %s141
      %p150 = scmp.eq.s32.totalorder %s23, 1
      %p151 = por %p149, %p150
      %p152 = scmp.ne.s32.totalorder %s141, %s142
      %p153 = scmp.eq.s32.totalorder %s23, 0
      %p154 = por %p152, %p153
      %p155 = scmp.ne.s32.totalorder %s141, %s142
      %p156 = scmp.eq.s32.totalorder %s24, 1
      %p157 = por %p155, %p156
      %p159 = scmp.ne.s32.totalorder %s142, %s158
      %p160 = scmp.eq.s32.totalorder %s24, 0
      %p161 = por %p159, %p160
      %p162 = scmp.le.s32.totalorder 1, %s18
      %p163 = scmp.lt.s32.totalorder %s18, 3
      %p164 = pnand %p162, %p163
      %p165 = pneg %p164
      // Predicated region
      $region9: #{tpu_custom_call.1} parent=5 // pred_check
        _
      $region10: #{tpu_custom_call.1} parent=5 // pred_check_branch
        %167 = sbr.rel (%p164) target = $region12
      $region11: #{tpu_custom_call.1} parent=5 // pred_region
        %s168 = ssub.s32 %s18, 1
        // Predicated region
        $region13: #{tpu_custom_call.1} parent=11 // pred_check
          %p169 = pneg %p65
        $region14: #{tpu_custom_call.1} parent=11 // pred_check_branch
          %171 = sbr.rel (%p169) target = $region16
        $region15: #{tpu_custom_call.1} parent=11 // pred_region
          %s173 = ssub.s32 2048, 2048
          %174 = vsyncadd [#allocation6], %s173
          %s175 = sshll.u32 [#allocation5], 4
          %s176 = int_to_ptr.vmem [resolvable:$true] %s175
          %181 = dma.hbm_to_vmem [thread:$0]  %s1, 2048, %s176, [#allocation6], 128, 128, 8
        $region16: #{tpu_custom_call.1} parent=11 // pred_fallthru
          _
        // Predicated region
        $region17: #{tpu_custom_call.1} parent=11 // pred_check
          %p182 = pneg %p86
        $region18: #{tpu_custom_call.1} parent=11 // pred_check_branch
          %184 = sbr.rel (%p182) target = $region20
        $region19: #{tpu_custom_call.1} parent=11 // pred_region
          _
        $region20: #{tpu_custom_call.1} parent=11 // pred_fallthru
          _
        // Predicated region
        $region21: #{tpu_custom_call.1} parent=11 // pred_check
          %p185 = pneg %p107
        $region22: #{tpu_custom_call.1} parent=11 // pred_check_branch
          %187 = sbr.rel (%p185) target = $region24
        $region23: #{tpu_custom_call.1} parent=11 // pred_region
          %s189 = ssub.s32 2048, 2048
          %190 = vsyncadd [#allocation6], %s189
          %s191 = sshll.u32 [#allocation7], 4
          %s192 = int_to_ptr.vmem [resolvable:$true] %s191
          %197 = dma.hbm_to_vmem [thread:$0]  %s3, 2048, %s192, [#allocation6], 128, 128, 8
        $region24: #{tpu_custom_call.1} parent=11 // pred_fallthru
          _
        // Predicated region
        $region25: #{tpu_custom_call.1} parent=11 // pred_check
          %p198 = pneg %p128
        $region26: #{tpu_custom_call.1} parent=11 // pred_check_branch
          %200 = sbr.rel (%p198) target = $region28
        $region27: #{tpu_custom_call.1} parent=11 // pred_region
          _
        $region28: #{tpu_custom_call.1} parent=11 // pred_fallthru
          _
      $region12: #{tpu_custom_call.1} parent=5 // pred_fallthru
        _
      %p201 = scmp.lt.s32.totalorder %s18, 2
      // Predicated region
      $region29: #{tpu_custom_call.1} parent=5 // pred_check
        %p202 = pneg %p201
      $region30: #{tpu_custom_call.1} parent=5 // pred_check_branch
        %204 = sbr.rel (%p202) target = $region32
      $region31: #{tpu_custom_call.1} parent=5 // pred_region
        // Predicated region
        $region33: #{tpu_custom_call.1} parent=31 // pred_check
          %p205 = pneg %p38
        $region34: #{tpu_custom_call.1} parent=31 // pred_check_branch
          %207 = sbr.rel (%p205) target = $region36
        $region35: #{tpu_custom_call.1} parent=31 // pred_region
          %s208 = sand.u32 %s28, 1
          %s209 = scalar_lea.sflag [#allocation3], %s208
          %s210 = sand.u32 %s28, 1
          %s211 = smul.addr %s210, 8
          %s212 = scalar_lea.vmem [#allocation2], %s211
          %s214 = ssub.s32 128, 128
          %215 = vsyncadd %s209, %s214
          %s216 = smul.addr %s18, 128
          %s217 = scalar_lea.hbm %s0, %s216
          %s219 = sshll.u32 %s212, 4
          %s220 = int_to_ptr.vmem [resolvable:$true] %s219
          %222 = dma.hbm_to_vmem [thread:$0]  %s217, 128, %s220, %s209
        $region36: #{tpu_custom_call.1} parent=31 // pred_fallthru
          _
      $region32: #{tpu_custom_call.1} parent=5 // pred_fallthru
        _
      %p223 = scmp.le.s32.totalorder 1, %s18
      %p224 = scmp.lt.s32.totalorder %s18, 3
      %p225 = pnand %p223, %p224
      %p226 = pneg %p225
      // Predicated region
      $region37: #{tpu_custom_call.1} parent=5 // pred_check
        _
      $region38: #{tpu_custom_call.1} parent=5 // pred_check_branch
        %228 = sbr.rel (%p225) target = $region40
      $region39: #{tpu_custom_call.1} parent=5 // pred_region
        %s229 = ssub.s32 %s18, 1
        %s230 = sand.u32 %s31, 1
        %s231 = scalar_lea.sflag [#allocation3], %s230
        %s232 = sand.u32 %s31, 1
        %s233 = smul.addr %s232, 8
        %s234 = scalar_lea.vmem [#allocation2], %s233
        // Predicated region
        $region41: #{tpu_custom_call.1} parent=39 // pred_check
          %p235 = pneg %p44
        $region42: #{tpu_custom_call.1} parent=39 // pred_check_branch
          %237 = sbr.rel (%p235) target = $region44
        $region43: #{tpu_custom_call.1} parent=39 // pred_region
          %238 = dma.done %s231, 128
        $region44: #{tpu_custom_call.1} parent=39 // pred_fallthru
          _
        // Predicated region
        $region45: #{tpu_custom_call.1} parent=39 // pred_check
          %p239 = pneg %p65
        $region46: #{tpu_custom_call.1} parent=39 // pred_check_branch
          %241 = sbr.rel (%p239) target = $region48
        $region47: #{tpu_custom_call.1} parent=39 // pred_region
          %242 = dma.done [#allocation6], 2048
        $region48: #{tpu_custom_call.1} parent=39 // pred_fallthru
          _
        // Predicated region
        $region49: #{tpu_custom_call.1} parent=39 // pred_check
          %p243 = pneg %p107
        $region50: #{tpu_custom_call.1} parent=39 // pred_check_branch
          %245 = sbr.rel (%p243) target = $region52
        $region51: #{tpu_custom_call.1} parent=39 // pred_region
          %246 = dma.done [#allocation6], 2048
        $region52: #{tpu_custom_call.1} parent=39 // pred_fallthru
          _
        %s247 = sand.u32 %s31, 1
        %s248 = scalar_lea.sflag [#allocation3], %s247
        %s249 = sand.u32 %s31, 1
        %s250 = smul.addr %s249, 8
        %s251 = scalar_lea.vmem [#allocation2], %s250
        %p252 = pneg %p44
        %p253 = pneg %p41
        %p254 = pneg %p65
        %p255 = pneg %p62
        %p256 = pneg %p86
        %p257 = pneg %p83
        %p258 = pneg %p107
        %p259 = pneg %p104
        %p260 = pneg %p128
        %p261 = pneg %p125
        %p262 = pneg %p154
        %p263 = pneg %p151
        %s264 = sand.u32 %s141, 1
        %s265 = scalar_lea.sflag [#allocation4], %s264
        %s266 = sand.u32 %s141, 1
        %s267 = smul.addr %s266, 8
        %s268 = scalar_lea.vmem [#allocation8], %s267
        %v269 = vld [vmem:[%s234] sm:$0xff]
        %v270 = vld [vmem:[#allocation5] sm:$0xff]
        %v271 = vld [vmem:[#allocation5 + $0x8] sm:$0xff]
        %v272 = vld [vmem:[#allocation5 + $0x10] sm:$0xff]
        %v273 = vld [vmem:[#allocation5 + $0x18] sm:$0xff]
        %v274 = vld [vmem:[#allocation5 + $0x20] sm:$0xff]
        %v275 = vld [vmem:[#allocation5 + $0x28] sm:$0xff]
        %v276 = vld [vmem:[#allocation5 + $0x30] sm:$0xff]
        %v277 = vld [vmem:[#allocation5 + $0x38] sm:$0xff]
        %v278 = vld [vmem:[#allocation5 + $0x40] sm:$0xff]
        %v279 = vld [vmem:[#allocation5 + $0x48] sm:$0xff]
        %v280 = vld [vmem:[#allocation5 + $0x50] sm:$0xff]
        %v281 = vld [vmem:[#allocation5 + $0x58] sm:$0xff]
        %v282 = vld [vmem:[#allocation5 + $0x60] sm:$0xff]
        %v283 = vld [vmem:[#allocation5 + $0x68] sm:$0xff]
        %v284 = vld [vmem:[#allocation5 + $0x70] sm:$0xff]
        %v285 = vld [vmem:[#allocation5 + $0x78] sm:$0xff]
        %v286 = vld [vmem:[%s2] sm:$0x1]
        %v288 = vlaneseq
        %v289 = vshrl.u32 %v288, 7
        %v290 = vsub.s32 0, %v289
        %v291 = vrot.slane %v286, %v290
        %293 = vmatprep.subr.mxu0 0.0
        %294 = vmatpush1.msra.mxu0 %v285
        %295 = vmatprep.subr.mxu0 0.0
        %296 = vmatpush1.msra.mxu0 %v284
        %297 = vmatprep.subr.mxu0 0.0
        %298 = vmatpush1.msra.mxu0 %v283
        %299 = vmatprep.subr.mxu0 0.0
        %300 = vmatpush1.msra.mxu0 %v282
        %301 = vmatprep.subr.mxu0 0.0
        %302 = vmatpush1.msra.mxu0 %v281
        %303 = vmatprep.subr.mxu0 0.0
        %304 = vmatpush1.msra.mxu0 %v280
        %305 = vmatprep.subr.mxu0 0.0
        %306 = vmatpush1.msra.mxu0 %v279
        %307 = vmatprep.subr.mxu0 0.0
        %308 = vmatpush1.msra.mxu0 %v278
        %309 = vmatprep.subr.mxu0 0.0
        %310 = vmatpush1.msra.mxu0 %v277
        %311 = vmatprep.subr.mxu0 0.0
        %312 = vmatpush1.msra.mxu0 %v276
        %313 = vmatprep.subr.mxu0 0.0
        %314 = vmatpush1.msra.mxu0 %v275
        %315 = vmatprep.subr.mxu0 0.0
        %316 = vmatpush1.msra.mxu0 %v274
        %317 = vmatprep.subr.mxu0 0.0
        %318 = vmatpush1.msra.mxu0 %v273
        %319 = vmatprep.subr.mxu0 0.0
        %320 = vmatpush1.msra.mxu0 %v272
        %321 = vmatprep.subr.mxu0 0.0
        %322 = vmatpush1.msra.mxu0 %v271
        %323 = vmatprep.subr.mxu0 0.0
        %324 = vmatpush1.msra.mxu0 %v270
        %325 = vmatprep.subr.mxu0 0.0
        %326 = vmatpush2.msra.mxu0 0.0
        %327 = vmatprep.subr.mxu0 0.0
        %328 = vmatpush2.msra.mxu0 0.0
        %329 = vmatprep.subr.mxu0 0.0
        %330 = vmatpush2.msra.mxu0 0.0
        %331 = vmatprep.subr.mxu0 0.0
        %332 = vmatpush2.msra.mxu0 0.0
        %333 = vmatprep.subr.mxu0 0.0
        %334 = vmatpush2.msra.mxu0 0.0
        %335 = vmatprep.subr.mxu0 0.0
        %336 = vmatpush2.msra.mxu0 0.0
        %337 = vmatprep.subr.mxu0 0.0
        %338 = vmatpush2.msra.mxu0 0.0
        %339 = vmatprep.subr.mxu0 0.0
        %340 = vmatpush2.msra.mxu0 0.0
        %341 = vmatprep.subr.mxu0 0.0
        %342 = vmatpush2.msra.mxu0 0.0
        %343 = vmatprep.subr.mxu0 0.0
        %344 = vmatpush2.msra.mxu0 0.0
        %345 = vmatprep.subr.mxu0 0.0
        %346 = vmatpush2.msra.mxu0 0.0
        %347 = vmatprep.subr.mxu0 0.0
        %348 = vmatpush2.msra.mxu0 0.0
        %349 = vmatprep.subr.mxu0 0.0
        %350 = vmatpush2.msra.mxu0 0.0
        %351 = vmatprep.subr.mxu0 0.0
        %352 = vmatpush2.msra.mxu0 0.0
        %353 = vmatprep.subr.mxu0 0.0
        %354 = vmatpush2.msra.mxu0 0.0
        %355 = vmatprep.subr.mxu0 0.0
        %356 = vmatpush2.msra.mxu0 0.0
        %357 = vmatprep.mubr.f32.mxu0 0.0
        %358 = vmatmul.mubr.f32.gmra.mxu0 %v269
        %v359 = vpop.f32.mrf.mxu0
        %v360 = vadd.f32 %v291, %v359
        %v361 = vpop.f32.mrf.mxu0
        %362 = vdwg.mxu0
        %v363 = vld [vmem:[#allocation7] sm:$0xff]
        %v364 = vld [vmem:[#allocation7 + $0x8] sm:$0xff]
        %v365 = vld [vmem:[#allocation7 + $0x10] sm:$0xff]
        %v366 = vld [vmem:[#allocation7 + $0x18] sm:$0xff]
        %v367 = vld [vmem:[#allocation7 + $0x20] sm:$0xff]
        %v368 = vld [vmem:[#allocation7 + $0x28] sm:$0xff]
        %v369 = vld [vmem:[#allocation7 + $0x30] sm:$0xff]
        %v370 = vld [vmem:[#allocation7 + $0x38] sm:$0xff]
        %v371 = vld [vmem:[#allocation7 + $0x40] sm:$0xff]
        %v372 = vld [vmem:[#allocation7 + $0x48] sm:$0xff]
        %v373 = vld [vmem:[#allocation7 + $0x50] sm:$0xff]
        %v374 = vld [vmem:[#allocation7 + $0x58] sm:$0xff]
        %v375 = vld [vmem:[#allocation7 + $0x60] sm:$0xff]
        %v376 = vld [vmem:[#allocation7 + $0x68] sm:$0xff]
        %v377 = vld [vmem:[#allocation7 + $0x70] sm:$0xff]
        %v378 = vld [vmem:[#allocation7 + $0x78] sm:$0xff]
        %v379 = vld [vmem:[%s4] sm:$0x1]
        %v381 = vlaneseq
        %v382 = vshrl.u32 %v381, 7
        %v383 = vsub.s32 0, %v382
        %v384 = vrot.slane %v379, %v383
        %386 = vmatprep.subr.mxu0 0.0
        %387 = vmatpush1.msra.mxu0 %v378
        %388 = vmatprep.subr.mxu0 0.0
        %389 = vmatpush1.msra.mxu0 %v377
        %390 = vmatprep.subr.mxu0 0.0
        %391 = vmatpush1.msra.mxu0 %v376
        %392 = vmatprep.subr.mxu0 0.0
        %393 = vmatpush1.msra.mxu0 %v375
        %394 = vmatprep.subr.mxu0 0.0
        %395 = vmatpush1.msra.mxu0 %v374
        %396 = vmatprep.subr.mxu0 0.0
        %397 = vmatpush1.msra.mxu0 %v373
        %398 = vmatprep.subr.mxu0 0.0
        %399 = vmatpush1.msra.mxu0 %v372
        %400 = vmatprep.subr.mxu0 0.0
        %401 = vmatpush1.msra.mxu0 %v371
        %402 = vmatprep.subr.mxu0 0.0
        %403 = vmatpush1.msra.mxu0 %v370
        %404 = vmatprep.subr.mxu0 0.0
        %405 = vmatpush1.msra.mxu0 %v369
        %406 = vmatprep.subr.mxu0 0.0
        %407 = vmatpush1.msra.mxu0 %v368
        %408 = vmatprep.subr.mxu0 0.0
        %409 = vmatpush1.msra.mxu0 %v367
        %410 = vmatprep.subr.mxu0 0.0
        %411 = vmatpush1.msra.mxu0 %v366
        %412 = vmatprep.subr.mxu0 0.0
        %413 = vmatpush1.msra.mxu0 %v365
        %414 = vmatprep.subr.mxu0 0.0
        %415 = vmatpush1.msra.mxu0 %v364
        %416 = vmatprep.subr.mxu0 0.0
        %417 = vmatpush1.msra.mxu0 %v363
        %418 = vmatprep.subr.mxu0 0.0
        %419 = vmatpush2.msra.mxu0 0.0
        %420 = vmatprep.subr.mxu0 0.0
        %421 = vmatpush2.msra.mxu0 0.0
        %422 = vmatprep.subr.mxu0 0.0
        %423 = vmatpush2.msra.mxu0 0.0
        %424 = vmatprep.subr.mxu0 0.0
        %425 = vmatpush2.msra.mxu0 0.0
        %426 = vmatprep.subr.mxu0 0.0
        %427 = vmatpush2.msra.mxu0 0.0
        %428 = vmatprep.subr.mxu0 0.0
        %429 = vmatpush2.msra.mxu0 0.0
        %430 = vmatprep.subr.mxu0 0.0
        %431 = vmatpush2.msra.mxu0 0.0
        %432 = vmatprep.subr.mxu0 0.0
        %433 = vmatpush2.msra.mxu0 0.0
        %434 = vmatprep.subr.mxu0 0.0
        %435 = vmatpush2.msra.mxu0 0.0
        %436 = vmatprep.subr.mxu0 0.0
        %437 = vmatpush2.msra.mxu0 0.0
        %438 = vmatprep.subr.mxu0 0.0
        %439 = vmatpush2.msra.mxu0 0.0
        %440 = vmatprep.subr.mxu0 0.0
        %441 = vmatpush2.msra.mxu0 0.0
        %442 = vmatprep.subr.mxu0 0.0
        %443 = vmatpush2.msra.mxu0 0.0
        %444 = vmatprep.subr.mxu0 0.0
        %445 = vmatpush2.msra.mxu0 0.0
        %446 = vmatprep.subr.mxu0 0.0
        %447 = vmatpush2.msra.mxu0 0.0
        %448 = vmatprep.subr.mxu0 0.0
        %449 = vmatpush2.msra.mxu0 0.0
        %450 = vmatprep.mubr.f32.mxu0 0.0
        %451 = vmatmul.mubr.f32.gmra.mxu0 %v360
        %v452 = vpop.f32.mrf.mxu0
        %v453 = vadd.f32 %v384, %v452
        %v454 = vpop.f32.mrf.mxu0
        %455 = vdwg.mxu0
        %456 = vst [vmem:[%s268] sm:$0xff] %v453
        %s457 = sand.u32 %s141, 1
        %s458 = scalar_lea.sflag [#allocation4], %s457
        %s459 = sand.u32 %s141, 1
        %s460 = smul.addr %s459, 8
        %s461 = scalar_lea.vmem [#allocation8], %s460
        // Predicated region
        $region53: #{tpu_custom_call.1} parent=39 // pred_check
          %p462 = pneg %p151
        $region54: #{tpu_custom_call.1} parent=39 // pred_check_branch
          %464 = sbr.rel (%p462) target = $region56
        $region55: #{tpu_custom_call.1} parent=39 // pred_region
          %s466 = ssub.s32 128, 128
          %467 = vsyncadd %s458, %s466
          %s468 = smul.addr %s23, 128
          %s469 = scalar_lea.hbm %s5, %s468
          %s471 = sshll.u32 %s461, 4
          %s472 = int_to_ptr.vmem [resolvable:$true] %s471
          %474 = dma.vmem_to_hbm [thread:$0]  %s472, 128, %s469, %s458
        $region56: #{tpu_custom_call.1} parent=39 // pred_fallthru
          _
      $region40: #{tpu_custom_call.1} parent=5 // pred_fallthru
        _
      %p475 = scmp.le.s32.totalorder 2, %s18
      // Predicated region
      $region57: #{tpu_custom_call.1} parent=5 // pred_check
        %p476 = pneg %p475
      $region58: #{tpu_custom_call.1} parent=5 // pred_check_branch
        %478 = sbr.rel (%p476) target = $region60
      $region59: #{tpu_custom_call.1} parent=5 // pred_region
        %s479 = ssub.s32 %s18, 2
        // Predicated region
        $region61: #{tpu_custom_call.1} parent=59 // pred_check
          %p480 = pneg %p157
        $region62: #{tpu_custom_call.1} parent=59 // pred_check_branch
          %482 = sbr.rel (%p480) target = $region64
        $region63: #{tpu_custom_call.1} parent=59 // pred_region
          %s483 = sand.u32 %s142, 1
          %s484 = scalar_lea.sflag [#allocation4], %s483
          %s485 = sand.u32 %s142, 1
          %s486 = smul.addr %s485, 8
          %s487 = scalar_lea.vmem [#allocation8], %s486
          %488 = dma.done %s484, 128
        $region64: #{tpu_custom_call.1} parent=59 // pred_fallthru
          _
      $region60: #{tpu_custom_call.1} parent=5 // pred_fallthru
        _
    $region6: #{tpu_custom_call.1} parent=1 // loop_footer
      %s22 = sadd.s32 1, %s18
    $region7: #{tpu_custom_call.1} parent=1 // loop_footer_branch
      %17 = sbr.rel target = $region3
    $region8: #{tpu_custom_call.1} parent=1 // loop_exit
      _
    %489 = vsyncpa [#allocation3], 1
    %s490 = scalar_lea.sflag [#allocation3], 1
    %491 = vsyncpa %s490, 1
    %492 = vsyncpa [#allocation6], 1
    %493 = vsyncpa [#allocation4], 1
    %s494 = scalar_lea.sflag [#allocation4], 1
    %495 = vsyncpa %s494, 1

</llo_original>
